<compile_context>
chip_gen: v6e
topology: v6e:2x2x1
jax: 0.10.0
libtpu: 0.0.40
codegen_flags: <defaults>
</compile_context>

<pallas_src>
import jax
import jax.numpy as jnp
from jax.experimental import pallas as pl
from jax.experimental.pallas import tpu as pltpu

IN_FEATURES = 13
OUT_FEATURES = 1

_TARGET_STEP_BYTES = 4 * 1024 * 1024     # ~HBM bytes of x moved per grid step
_VMEM_LIMIT_BYTES = 32 * 1024 * 1024     # safe on v5e / v6e / v7x


def _linear_kernel(x_ref, s_ref, b_ref, o_ref):
    # x_ref: [T, R*13] VMEM tile, s_ref: [R*13, R] VMEM (resident constant),
    # b_ref: [1] f32 SMEM scalar, o_ref: [T, R] VMEM tile.
    y = jnp.dot(x_ref[...], s_ref[...], preferred_element_type=jnp.float32)
    o_ref[...] = (y + b_ref[0]).astype(o_ref.dtype)


def net_forward(x, weight, bias):
    """Pallas forward for Net (nn.Linear(13, 1)): y = x @ W.T + b.

    x: (B, 13), weight: (1, 13), bias: (1,).  Returns (B, 1).
    """
    batch = x.shape[0]
    dtype = x.dtype

    # Samples packed per repacked row.  R=128 gives a fully lane-dense input
    # (last dim 1664 = 13 vregs) and a lane-dense 128-wide output.  For
    # batches that are only 8-aligned (or ragged) fall back to R=8.
    if batch >= 128 and batch % 128 == 0:
        r = 128
    else:
        r = 8
    pad = (-batch) % r
    # Alignment pad only when the batch is not even 8-aligned (tiny copy for
    # small batches; pass 8-aligned batches to avoid it entirely).
    xp = x if pad == 0 else jnp.pad(x, ((0, pad), (0, 0)))
    padded = batch + pad

    rows = padded // r
    k = r * IN_FEATURES
    x2 = xp.reshape(rows, k)          # free reshape of a contiguous row-major array

    # Block-diagonal selection matrix: S[13*j + f, j] = w[f].
    w_col = weight.reshape(IN_FEATURES, 1).astype(dtype)
    sel = jnp.kron(jnp.eye(r, dtype=dtype), w_col)            # (k, r)
    bias_smem = bias.reshape(OUT_FEATURES).astype(jnp.float32)

    # Row tile sized for ~_TARGET_STEP_BYTES of x per grid step (multiple of 8).
    itemsize = jnp.dtype(dtype).itemsize
    row_bytes = k * itemsize
    tile = max(8, (_TARGET_STEP_BYTES // row_bytes) // 8 * 8)
    tile = min(tile, rows)            # == rows -> full-dim block, no 8-multiple needed
    if tile == rows and rows >= 16:
        # Split into >=2 steps so v7x's two TensorCores both get work.
        tile = (((rows + 1) // 2) + 7) // 8 * 8
    grid = pl.cdiv(rows, tile)

    bytes_accessed = (rows * k + rows * r + k * r) * itemsize + 4

    out2 = pl.pallas_call(
        _linear_kernel,
        out_shape=jax.ShapeDtypeStruct((rows, r), dtype),
        grid=(grid,),
        in_specs=[
            pl.BlockSpec((tile, k), lambda i: (i, 0)),             # x row tile
            pl.BlockSpec((k, r), lambda i: (0, 0)),                # selection matrix, resident
            pl.BlockSpec(memory_space=pltpu.MemorySpace.SMEM),     # bias scalar
        ],
        out_specs=pl.BlockSpec((tile, r), lambda i: (i, 0)),
        compiler_params=pltpu.CompilerParams(
            dimension_semantics=("parallel",),
            vmem_limit_bytes=_VMEM_LIMIT_BYTES,
        ),
        cost_estimate=pl.CostEstimate(
            flops=2 * rows * k * r,
            transcendentals=0,
            bytes_accessed=bytes_accessed,
        ),
    )(x2, sel, bias_smem)

    out = out2.reshape(padded, OUT_FEATURES)
    if padded != batch:
        out = out[:batch]
    return out


if __name__ == "__main__":
    key = jax.random.PRNGKey(0)
    kx, kw, kb = jax.random.split(key, 3)

    # Deterministic synthetic parameters (same shapes as nn.Linear(13, 1)).
    bound = 1.0 / (IN_FEATURES ** 0.5)
    weight = jax.random.uniform(
        kw, (OUT_FEATURES, IN_FEATURES), jnp.float32, minval=-bound, maxval=bound
    )
    bias = jax.random.uniform(
        kb, (OUT_FEATURES,), jnp.float32, minval=-bound, maxval=bound
    )

    fwd = jax.jit(net_forward)

    # batch=256 exercises the lane-dense R=128 path; batch=13 the ragged path.
    for batch in (256, 13):
        x = jax.random.normal(
            jax.random.fold_in(kx, batch), (batch, IN_FEATURES), jnp.float32
        )
        out = jax.block_until_ready(fwd(x, weight, bias))
        ref = x @ weight.T + bias
        assert out.shape == (batch, OUT_FEATURES)
        assert jnp.allclose(out, ref, atol=1e-5, rtol=1e-5)

    print("KERNEL_OK")
</pallas_src>

<mosaic_0001>
module attributes {stable_mosaic.version = 11 : i64} {
  func.func @_linear_kernel(%arg0: i32, %arg1: memref<2x1664xf32, #tpu.memory_space<vmem>>, %arg2: memref<1664x128xf32, #tpu.memory_space<vmem>>, %arg3: memref<1xf32, #tpu.memory_space<smem>>, %arg4: memref<2x128xf32, #tpu.memory_space<vmem>>) attributes {dimension_semantics = [#tpu.dimension_semantics<parallel>], iteration_bounds = array<i64: 1>, scalar_prefetch = 0 : i64, scratch_operands = 0 : i64, tpu.core_type = #tpu.core_type<tc>, window_params = [{transform_indices = @transform_0, window_bounds = array<i64: 2, 1664>}, {pipeline_mode = #tpu.pipeline_mode<synchronous>, transform_indices = @transform_1, window_bounds = array<i64: 1664, 128>}, {transform_indices = @transform_2, window_bounds = array<i64: 1>}, {transform_indices = @transform_3, window_bounds = array<i64: 2, 128>}]} {
    %c0 = arith.constant 0 : index
    %c0_0 = arith.constant 0 : index
    %0 = vector.load %arg1[%c0, %c0_0] : memref<2x1664xf32, #tpu.memory_space<vmem>>, vector<2x1664xf32>
    %c0_1 = arith.constant 0 : index
    %c0_2 = arith.constant 0 : index
    %1 = vector.load %arg2[%c0_1, %c0_2] : memref<1664x128xf32, #tpu.memory_space<vmem>>, vector<1664x128xf32>
    %cst = arith.constant dense<0.000000e+00> : vector<2x128xf32>
    %2 = tpu.matmul %0, %1, %cst {dimension_numbers = #tpu.dot_dimension_numbers<[1], [0], [0], [1], [0, 0, 1, 1], [], []>} : vector<2x1664xf32>, vector<1664x128xf32>, vector<2x128xf32> -> vector<2x128xf32>
    %c0_3 = arith.constant 0 : index
    %3 = memref.load %arg3[%c0_3] : memref<1xf32, #tpu.memory_space<smem>>
    %4 = vector.broadcast %3 : f32 to vector<2x128xf32>
    %5 = arith.addf %2, %4 : vector<2x128xf32>
    %c0_4 = arith.constant 0 : index
    %c0_5 = arith.constant 0 : index
    %6 = vector.load %arg4[%c0_4, %c0_5] : memref<2x128xf32, #tpu.memory_space<vmem>>, vector<2x128xf32>
    tpu.vector_store %arg4[%c0_4, %c0_5], %5 {strides = array<i32>} : memref<2x128xf32, #tpu.memory_space<vmem>>, vector<2x128xf32>,
    return
  }
  func.func @transform_0(%arg0: i32) -> (i32, i32) {
    %c0_i32 = arith.constant 0 : i32
    %c0_i32_0 = arith.constant 0 : i32
    return %arg0, %c0_i32 : i32, i32
  }
  func.func @transform_1(%arg0: i32) -> (i32, i32) {
    %c0_i32 = arith.constant 0 : i32
    %c0_i32_0 = arith.constant 0 : i32
    %c0_i32_1 = arith.constant 0 : i32
    return %c0_i32, %c0_i32_0 : i32, i32
  }
  func.func @transform_2(%arg0: i32) -> i32 {
    %c0_i32 = arith.constant 0 : i32
    %c0_i32_0 = arith.constant 0 : i32
    return %c0_i32 : i32
  }
  func.func @transform_3(%arg0: i32) -> (i32, i32) {
    %c0_i32 = arith.constant 0 : i32
    %c0_i32_0 = arith.constant 0 : i32
    return %arg0, %c0_i32 : i32, i32
  }
}

</mosaic_0001>

<llo_original>
// kernel: net_forward.1
$region0: #{net_forward.1}
  #allocation0 [shape = 'u32[]', space=smem, size = 0x4, offset = 0x4, fixed_abs, tag = 'smem constant byte address 0x4 - core index']
  #allocation1 [shape = 'u32[144,128]{1,0:T(1,128)}', space=vmem, size = 0x12000, scoped, tag = 'internal scratch']
  #allocation2 [shape = 'f32[1]{0:T(128)S(6)}', space=smem, size = 0x200, scoped, tag = 'scoped memory for net_forward.1']
  %s0 = inlined_call_operand.vmem [shape: f32[2,1664], index: 0, kind: input, shape index: {}]
  %s1 = inlined_call_operand.vmem [shape: f32[1664,128], index: 1, kind: input, shape index: {}]
  %s2 = inlined_call_operand.<no memory space> [shape: f32[1], index: 2, kind: input, shape index: {}]
  %s3 = inlined_call_operand.hbm [shape: f32[2,128], index: 3, kind: output, shape index: {}]
  %s4 = sld [smem:[#allocation0]]
  $region22: #{net_forward.1} parent=0
    _
  %s6 = ssub.s32 1, %s4
  %s7 = scalar_select 0, %s6, %s4
  %8 = sst [smem:[#allocation2]] %s2
  $region1: #{net_forward.1} parent=0
    #allocation3 [shape = 'u8[1024]{0}', space=vmem, size = 0x400, scoped, tag = 'output window, operand 0, single buffered']
    #allocation4 [shape = 's32[1]{0}', space=sflag, size = 0x4, scoped, tag = 'scoped memory for net_forward.1']
    %9 = vsyncpa [#allocation4], 0
    // Predicated region
    $region2: #{net_forward.1} parent=1 // pred_check
      _
    $region3: #{net_forward.1} parent=1 // pred_check_branch
      %11 = sbr.rel (0) target = $region5
    $region4: #{net_forward.1} parent=1 // pred_region
      _
    $region5: #{net_forward.1} parent=1 // pred_fallthru
      _
    // Predicated region
    $region6: #{net_forward.1} parent=1 // pred_check
      _
    $region7: #{net_forward.1} parent=1 // pred_check_branch
      %13 = sbr.rel (0) target = $region9
    $region8: #{net_forward.1} parent=1 // pred_region
      _
    $region9: #{net_forward.1} parent=1 // pred_fallthru
      _
    // Predicated region
    $region10: #{net_forward.1} parent=1 // pred_check
      _
    $region11: #{net_forward.1} parent=1 // pred_check_branch
      %15 = sbr.rel (0) target = $region13
    $region12: #{net_forward.1} parent=1 // pred_region
      _
    $region13: #{net_forward.1} parent=1 // pred_fallthru
      _
    %v16 = vld [vmem:[%s0] sm:$0xff]
    %v17 = vld [vmem:[%s0 + $0x8] sm:$0xff]
    %v18 = vld [vmem:[%s0 + $0x10] sm:$0xff]
    %v19 = vld [vmem:[%s0 + $0x18] sm:$0x3]
    %v20 = vld [vmem:[%s1] sm:$0xff]
    %v21 = vld [vmem:[%s1 + $0x8] sm:$0xff]
    %v22 = vld [vmem:[%s1 + $0x10] sm:$0xff]
    %v23 = vld [vmem:[%s1 + $0x18] sm:$0xff]
    %v24 = vld [vmem:[%s1 + $0x20] sm:$0xff]
    %v25 = vld [vmem:[%s1 + $0x28] sm:$0xff]
    %v26 = vld [vmem:[%s1 + $0x30] sm:$0xff]
    %v27 = vld [vmem:[%s1 + $0x38] sm:$0xff]
    %v28 = vld [vmem:[%s1 + $0x40] sm:$0xff]
    %v29 = vld [vmem:[%s1 + $0x48] sm:$0xff]
    %v30 = vld [vmem:[%s1 + $0x50] sm:$0xff]
    %v31 = vld [vmem:[%s1 + $0x58] sm:$0xff]
    %v32 = vld [vmem:[%s1 + $0x60] sm:$0xff]
    %v33 = vld [vmem:[%s1 + $0x68] sm:$0xff]
    %v34 = vld [vmem:[%s1 + $0x70] sm:$0xff]
    %v35 = vld [vmem:[%s1 + $0x78] sm:$0xff]
    %v36 = vld [vmem:[%s1 + $0x80] sm:$0xff]
    %v37 = vld [vmem:[%s1 + $0x88] sm:$0xff]
    %v38 = vld [vmem:[%s1 + $0x90] sm:$0xff]
    %v39 = vld [vmem:[%s1 + $0x98] sm:$0xff]
    %v40 = vld [vmem:[%s1 + $0xa0] sm:$0xff]
    %v41 = vld [vmem:[%s1 + $0xa8] sm:$0xff]
    %v42 = vld [vmem:[%s1 + $0xb0] sm:$0xff]
    %v43 = vld [vmem:[%s1 + $0xb8] sm:$0xff]
    %v44 = vld [vmem:[%s1 + $0xc0] sm:$0xff]
    %v45 = vld [vmem:[%s1 + $0xc8] sm:$0xff]
    %v46 = vld [vmem:[%s1 + $0xd0] sm:$0xff]
    %v47 = vld [vmem:[%s1 + $0xd8] sm:$0xff]
    %v48 = vld [vmem:[%s1 + $0xe0] sm:$0xff]
    %v49 = vld [vmem:[%s1 + $0xe8] sm:$0xff]
    %v50 = vld [vmem:[%s1 + $0xf0] sm:$0xff]
    %v51 = vld [vmem:[%s1 + $0xf8] sm:$0xff]
    %v52 = vld [vmem:[%s1 + $0x100] sm:$0xff]
    %v53 = vld [vmem:[%s1 + $0x108] sm:$0xff]
    %v54 = vld [vmem:[%s1 + $0x110] sm:$0xff]
    %v55 = vld [vmem:[%s1 + $0x118] sm:$0xff]
    %v56 = vld [vmem:[%s1 + $0x120] sm:$0xff]
    %v57 = vld [vmem:[%s1 + $0x128] sm:$0xff]
    %v58 = vld [vmem:[%s1 + $0x130] sm:$0xff]
    %v59 = vld [vmem:[%s1 + $0x138] sm:$0xff]
    %v60 = vld [vmem:[%s1 + $0x140] sm:$0xff]
    %v61 = vld [vmem:[%s1 + $0x148] sm:$0xff]
    %v62 = vld [vmem:[%s1 + $0x150] sm:$0xff]
    %v63 = vld [vmem:[%s1 + $0x158] sm:$0xff]
    %v64 = vld [vmem:[%s1 + $0x160] sm:$0xff]
    %v65 = vld [vmem:[%s1 + $0x168] sm:$0xff]
    %v66 = vld [vmem:[%s1 + $0x170] sm:$0xff]
    %v67 = vld [vmem:[%s1 + $0x178] sm:$0xff]
    %v68 = vld [vmem:[%s1 + $0x180] sm:$0xff]
    %v69 = vld [vmem:[%s1 + $0x188] sm:$0xff]
    %v70 = vld [vmem:[%s1 + $0x190] sm:$0xff]
    %v71 = vld [vmem:[%s1 + $0x198] sm:$0xff]
    %v72 = vld [vmem:[%s1 + $0x1a0] sm:$0xff]
    %v73 = vld [vmem:[%s1 + $0x1a8] sm:$0xff]
    %v74 = vld [vmem:[%s1 + $0x1b0] sm:$0xff]
    %v75 = vld [vmem:[%s1 + $0x1b8] sm:$0xff]
    %v76 = vld [vmem:[%s1 + $0x1c0] sm:$0xff]
    %v77 = vld [vmem:[%s1 + $0x1c8] sm:$0xff]
    %v78 = vld [vmem:[%s1 + $0x1d0] sm:$0xff]
    %v79 = vld [vmem:[%s1 + $0x1d8] sm:$0xff]
    %v80 = vld [vmem:[%s1 + $0x1e0] sm:$0xff]
    %v81 = vld [vmem:[%s1 + $0x1e8] sm:$0xff]
    %v82 = vld [vmem:[%s1 + $0x1f0] sm:$0xff]
    %v83 = vld [vmem:[%s1 + $0x1f8] sm:$0xff]
    %v84 = vld [vmem:[%s1 + $0x200] sm:$0xff]
    %v85 = vld [vmem:[%s1 + $0x208] sm:$0xff]
    %v86 = vld [vmem:[%s1 + $0x210] sm:$0xff]
    %v87 = vld [vmem:[%s1 + $0x218] sm:$0xff]
    %v88 = vld [vmem:[%s1 + $0x220] sm:$0xff]
    %v89 = vld [vmem:[%s1 + $0x228] sm:$0xff]
    %v90 = vld [vmem:[%s1 + $0x230] sm:$0xff]
    %v91 = vld [vmem:[%s1 + $0x238] sm:$0xff]
    %v92 = vld [vmem:[%s1 + $0x240] sm:$0xff]
    %v93 = vld [vmem:[%s1 + $0x248] sm:$0xff]
    %v94 = vld [vmem:[%s1 + $0x250] sm:$0xff]
    %v95 = vld [vmem:[%s1 + $0x258] sm:$0xff]
    %v96 = vld [vmem:[%s1 + $0x260] sm:$0xff]
    %v97 = vld [vmem:[%s1 + $0x268] sm:$0xff]
    %v98 = vld [vmem:[%s1 + $0x270] sm:$0xff]
    %v99 = vld [vmem:[%s1 + $0x278] sm:$0xff]
    %v100 = vld [vmem:[%s1 + $0x280] sm:$0xff]
    %v101 = vld [vmem:[%s1 + $0x288] sm:$0xff]
    %v102 = vld [vmem:[%s1 + $0x290] sm:$0xff]
    %v103 = vld [vmem:[%s1 + $0x298] sm:$0xff]
    %v104 = vld [vmem:[%s1 + $0x2a0] sm:$0xff]
    %v105 = vld [vmem:[%s1 + $0x2a8] sm:$0xff]
    %v106 = vld [vmem:[%s1 + $0x2b0] sm:$0xff]
    %v107 = vld [vmem:[%s1 + $0x2b8] sm:$0xff]
    %v108 = vld [vmem:[%s1 + $0x2c0] sm:$0xff]
    %v109 = vld [vmem:[%s1 + $0x2c8] sm:$0xff]
    %v110 = vld [vmem:[%s1 + $0x2d0] sm:$0xff]
    %v111 = vld [vmem:[%s1 + $0x2d8] sm:$0xff]
    %v112 = vld [vmem:[%s1 + $0x2e0] sm:$0xff]
    %v113 = vld [vmem:[%s1 + $0x2e8] sm:$0xff]
    %v114 = vld [vmem:[%s1 + $0x2f0] sm:$0xff]
    %v115 = vld [vmem:[%s1 + $0x2f8] sm:$0xff]
    %v116 = vld [vmem:[%s1 + $0x300] sm:$0xff]
    %v117 = vld [vmem:[%s1 + $0x308] sm:$0xff]
    %v118 = vld [vmem:[%s1 + $0x310] sm:$0xff]
    %v119 = vld [vmem:[%s1 + $0x318] sm:$0xff]
    %v120 = vld [vmem:[%s1 + $0x320] sm:$0xff]
    %v121 = vld [vmem:[%s1 + $0x328] sm:$0xff]
    %v122 = vld [vmem:[%s1 + $0x330] sm:$0xff]
    %v123 = vld [vmem:[%s1 + $0x338] sm:$0xff]
    %v124 = vld [vmem:[%s1 + $0x340] sm:$0xff]
    %v125 = vld [vmem:[%s1 + $0x348] sm:$0xff]
    %v126 = vld [vmem:[%s1 + $0x350] sm:$0xff]
    %v127 = vld [vmem:[%s1 + $0x358] sm:$0xff]
    %v128 = vld [vmem:[%s1 + $0x360] sm:$0xff]
    %v129 = vld [vmem:[%s1 + $0x368] sm:$0xff]
    %v130 = vld [vmem:[%s1 + $0x370] sm:$0xff]
    %v131 = vld [vmem:[%s1 + $0x378] sm:$0xff]
    %v132 = vld [vmem:[%s1 + $0x380] sm:$0xff]
    %v133 = vld [vmem:[%s1 + $0x388] sm:$0xff]
    %v134 = vld [vmem:[%s1 + $0x390] sm:$0xff]
    %v135 = vld [vmem:[%s1 + $0x398] sm:$0xff]
    %v136 = vld [vmem:[%s1 + $0x3a0] sm:$0xff]
    %v137 = vld [vmem:[%s1 + $0x3a8] sm:$0xff]
    %v138 = vld [vmem:[%s1 + $0x3b0] sm:$0xff]
    %v139 = vld [vmem:[%s1 + $0x3b8] sm:$0xff]
    %v140 = vld [vmem:[%s1 + $0x3c0] sm:$0xff]
    %v141 = vld [vmem:[%s1 + $0x3c8] sm:$0xff]
    %v142 = vld [vmem:[%s1 + $0x3d0] sm:$0xff]
    %v143 = vld [vmem:[%s1 + $0x3d8] sm:$0xff]
    %v144 = vld [vmem:[%s1 + $0x3e0] sm:$0xff]
    %v145 = vld [vmem:[%s1 + $0x3e8] sm:$0xff]
    %v146 = vld [vmem:[%s1 + $0x3f0] sm:$0xff]
    %v147 = vld [vmem:[%s1 + $0x3f8] sm:$0xff]
    %v148 = vld [vmem:[%s1 + $0x400] sm:$0xff]
    %v149 = vld [vmem:[%s1 + $0x408] sm:$0xff]
    %v150 = vld [vmem:[%s1 + $0x410] sm:$0xff]
    %v151 = vld [vmem:[%s1 + $0x418] sm:$0xff]
    %v152 = vld [vmem:[%s1 + $0x420] sm:$0xff]
    %v153 = vld [vmem:[%s1 + $0x428] sm:$0xff]
    %v154 = vld [vmem:[%s1 + $0x430] sm:$0xff]
    %v155 = vld [vmem:[%s1 + $0x438] sm:$0xff]
    %v156 = vld [vmem:[%s1 + $0x440] sm:$0xff]
    %v157 = vld [vmem:[%s1 + $0x448] sm:$0xff]
    %v158 = vld [vmem:[%s1 + $0x450] sm:$0xff]
    %v159 = vld [vmem:[%s1 + $0x458] sm:$0xff]
    %v160 = vld [vmem:[%s1 + $0x460] sm:$0xff]
    %v161 = vld [vmem:[%s1 + $0x468] sm:$0xff]
    %v162 = vld [vmem:[%s1 + $0x470] sm:$0xff]
    %v163 = vld [vmem:[%s1 + $0x478] sm:$0xff]
    %v164 = vld [vmem:[%s1 + $0x480] sm:$0xff]
    %v165 = vld [vmem:[%s1 + $0x488] sm:$0xff]
    %v166 = vld [vmem:[%s1 + $0x490] sm:$0xff]
    %v167 = vld [vmem:[%s1 + $0x498] sm:$0xff]
    %v168 = vld [vmem:[%s1 + $0x4a0] sm:$0xff]
    %v169 = vld [vmem:[%s1 + $0x4a8] sm:$0xff]
    %v170 = vld [vmem:[%s1 + $0x4b0] sm:$0xff]
    %v171 = vld [vmem:[%s1 + $0x4b8] sm:$0xff]
    %v172 = vld [vmem:[%s1 + $0x4c0] sm:$0xff]
    %v173 = vld [vmem:[%s1 + $0x4c8] sm:$0xff]
    %v174 = vld [vmem:[%s1 + $0x4d0] sm:$0xff]
    %v175 = vld [vmem:[%s1 + $0x4d8] sm:$0xff]
    %v176 = vld [vmem:[%s1 + $0x4e0] sm:$0xff]
    %v177 = vld [vmem:[%s1 + $0x4e8] sm:$0xff]
    %v178 = vld [vmem:[%s1 + $0x4f0] sm:$0xff]
    %v179 = vld [vmem:[%s1 + $0x4f8] sm:$0xff]
    %v180 = vld [vmem:[%s1 + $0x500] sm:$0xff]
    %v181 = vld [vmem:[%s1 + $0x508] sm:$0xff]
    %v182 = vld [vmem:[%s1 + $0x510] sm:$0xff]
    %v183 = vld [vmem:[%s1 + $0x518] sm:$0xff]
    %v184 = vld [vmem:[%s1 + $0x520] sm:$0xff]
    %v185 = vld [vmem:[%s1 + $0x528] sm:$0xff]
    %v186 = vld [vmem:[%s1 + $0x530] sm:$0xff]
    %v187 = vld [vmem:[%s1 + $0x538] sm:$0xff]
    %v188 = vld [vmem:[%s1 + $0x540] sm:$0xff]
    %v189 = vld [vmem:[%s1 + $0x548] sm:$0xff]
    %v190 = vld [vmem:[%s1 + $0x550] sm:$0xff]
    %v191 = vld [vmem:[%s1 + $0x558] sm:$0xff]
    %v192 = vld [vmem:[%s1 + $0x560] sm:$0xff]
    %v193 = vld [vmem:[%s1 + $0x568] sm:$0xff]
    %v194 = vld [vmem:[%s1 + $0x570] sm:$0xff]
    %v195 = vld [vmem:[%s1 + $0x578] sm:$0xff]
    %v196 = vld [vmem:[%s1 + $0x580] sm:$0xff]
    %v197 = vld [vmem:[%s1 + $0x588] sm:$0xff]
    %v198 = vld [vmem:[%s1 + $0x590] sm:$0xff]
    %v199 = vld [vmem:[%s1 + $0x598] sm:$0xff]
    %v200 = vld [vmem:[%s1 + $0x5a0] sm:$0xff]
    %v201 = vld [vmem:[%s1 + $0x5a8] sm:$0xff]
    %v202 = vld [vmem:[%s1 + $0x5b0] sm:$0xff]
    %v203 = vld [vmem:[%s1 + $0x5b8] sm:$0xff]
    %v204 = vld [vmem:[%s1 + $0x5c0] sm:$0xff]
    %v205 = vld [vmem:[%s1 + $0x5c8] sm:$0xff]
    %v206 = vld [vmem:[%s1 + $0x5d0] sm:$0xff]
    %v207 = vld [vmem:[%s1 + $0x5d8] sm:$0xff]
    %v208 = vld [vmem:[%s1 + $0x5e0] sm:$0xff]
    %v209 = vld [vmem:[%s1 + $0x5e8] sm:$0xff]
    %v210 = vld [vmem:[%s1 + $0x5f0] sm:$0xff]
    %v211 = vld [vmem:[%s1 + $0x5f8] sm:$0xff]
    %v212 = vld [vmem:[%s1 + $0x600] sm:$0xff]
    %v213 = vld [vmem:[%s1 + $0x608] sm:$0xff]
    %v214 = vld [vmem:[%s1 + $0x610] sm:$0xff]
    %v215 = vld [vmem:[%s1 + $0x618] sm:$0xff]
    %v216 = vld [vmem:[%s1 + $0x620] sm:$0xff]
    %v217 = vld [vmem:[%s1 + $0x628] sm:$0xff]
    %v218 = vld [vmem:[%s1 + $0x630] sm:$0xff]
    %v219 = vld [vmem:[%s1 + $0x638] sm:$0xff]
    %v220 = vld [vmem:[%s1 + $0x640] sm:$0xff]
    %v221 = vld [vmem:[%s1 + $0x648] sm:$0xff]
    %v222 = vld [vmem:[%s1 + $0x650] sm:$0xff]
    %v223 = vld [vmem:[%s1 + $0x658] sm:$0xff]
    %v224 = vld [vmem:[%s1 + $0x660] sm:$0xff]
    %v225 = vld [vmem:[%s1 + $0x668] sm:$0xff]
    %v226 = vld [vmem:[%s1 + $0x670] sm:$0xff]
    %v227 = vld [vmem:[%s1 + $0x678] sm:$0xff]
    %s228 = sld [smem:[#allocation2]]
    %v229 = vstv %s228
    %v234 = vcombine.high %v16, %v16
    %v236 = vunpack.c.l.s4 1983009808
    %v237 = vunpack.c.0.s8 %v236
    %v238 = vlaneseq
    %v239 = vshrl.u32 %v238, 7
    %v240 = vsub.s32 %v237, %v239
    %v241 = vrot.slane %v16, %v240
    %v243 = vunpack.c.l.s4 1983009808
    %v244 = vunpack.c.0.s8 %v243
    %v245 = vlaneseq
    %v246 = vshrl.u32 %v245, 7
    %v247 = vsub.s32 %v244, %v246
    %v248 = vrot.slane %v234, %v247
    %v249 = vcombine.high %v241, %v241
    %v250 = vcombine.high %v248, %v248
    %v251 = vcombine.high %v17, %v17
    %v253 = vunpack.c.l.s4 1983009808
    %v254 = vunpack.c.0.s8 %v253
    %v255 = vlaneseq
    %v256 = vshrl.u32 %v255, 7
    %v257 = vsub.s32 %v254, %v256
    %v258 = vrot.slane %v17, %v257
    %v260 = vunpack.c.l.s4 1983009808
    %v261 = vunpack.c.0.s8 %v260
    %v262 = vlaneseq
    %v263 = vshrl.u32 %v262, 7
    %v264 = vsub.s32 %v261, %v263
    %v265 = vrot.slane %v251, %v264
    %v266 = vcombine.high %v258, %v258
    %v267 = vcombine.high %v265, %v265
    %v268 = vcombine.high %v18, %v18
    %v270 = vunpack.c.l.s4 1983009808
    %v271 = vunpack.c.0.s8 %v270
    %v272 = vlaneseq
    %v273 = vshrl.u32 %v272, 7
    %v274 = vsub.s32 %v271, %v273
    %v275 = vrot.slane %v18, %v274
    %v277 = vunpack.c.l.s4 1983009808
    %v278 = vunpack.c.0.s8 %v277
    %v279 = vlaneseq
    %v280 = vshrl.u32 %v279, 7
    %v281 = vsub.s32 %v278, %v280
    %v282 = vrot.slane %v268, %v281
    %v283 = vcombine.high %v275, %v275
    %v284 = vcombine.high %v282, %v282
    %v286 = vunpack.c.l.s4 1983009808
    %v287 = vunpack.c.0.s8 %v286
    %v288 = vlaneseq
    %v289 = vshrl.u32 %v288, 7
    %v290 = vsub.s32 %v287, %v289
    %v291 = vrot.slane %v19, %v290
    %305 = vmatprep.subr.mxu0 0.0
    %306 = vmatpush1.msra.mxu0 %v35
    %307 = vmatprep.subr.mxu0 0.0
    %308 = vmatpush1.msra.mxu0 %v34
    %309 = vmatprep.subr.mxu0 0.0
    %310 = vmatpush1.msra.mxu0 %v33
    %311 = vmatprep.subr.mxu0 0.0
    %312 = vmatpush1.msra.mxu0 %v32
    %313 = vmatprep.subr.mxu0 0.0
    %314 = vmatpush1.msra.mxu0 %v31
    %315 = vmatprep.subr.mxu0 0.0
    %316 = vmatpush1.msra.mxu0 %v30
    %317 = vmatprep.subr.mxu0 0.0
    %318 = vmatpush1.msra.mxu0 %v29
    %319 = vmatprep.subr.mxu0 0.0
    %320 = vmatpush1.msra.mxu0 %v28
    %321 = vmatprep.subr.mxu0 0.0
    %322 = vmatpush1.msra.mxu0 %v27
    %323 = vmatprep.subr.mxu0 0.0
    %324 = vmatpush1.msra.mxu0 %v26
    %325 = vmatprep.subr.mxu0 0.0
    %326 = vmatpush1.msra.mxu0 %v25
    %327 = vmatprep.subr.mxu0 0.0
    %328 = vmatpush1.msra.mxu0 %v24
    %329 = vmatprep.subr.mxu0 0.0
    %330 = vmatpush1.msra.mxu0 %v23
    %331 = vmatprep.subr.mxu0 0.0
    %332 = vmatpush1.msra.mxu0 %v22
    %333 = vmatprep.subr.mxu0 0.0
    %334 = vmatpush1.msra.mxu0 %v21
    %335 = vmatprep.subr.mxu0 0.0
    %336 = vmatpush1.msra.mxu0 %v20
    %337 = vmatprep.subr.mxu0 0.0
    %338 = vmatpush2.msra.mxu0 %v51
    %339 = vmatprep.subr.mxu0 0.0
    %340 = vmatpush2.msra.mxu0 %v50
    %341 = vmatprep.subr.mxu0 0.0
    %342 = vmatpush2.msra.mxu0 %v49
    %343 = vmatprep.subr.mxu0 0.0
    %344 = vmatpush2.msra.mxu0 %v48
    %345 = vmatprep.subr.mxu0 0.0
    %346 = vmatpush2.msra.mxu0 %v47
    %347 = vmatprep.subr.mxu0 0.0
    %348 = vmatpush2.msra.mxu0 %v46
    %349 = vmatprep.subr.mxu0 0.0
    %350 = vmatpush2.msra.mxu0 %v45
    %351 = vmatprep.subr.mxu0 0.0
    %352 = vmatpush2.msra.mxu0 %v44
    %353 = vmatprep.subr.mxu0 0.0
    %354 = vmatpush2.msra.mxu0 %v43
    %355 = vmatprep.subr.mxu0 0.0
    %356 = vmatpush2.msra.mxu0 %v42
    %357 = vmatprep.subr.mxu0 0.0
    %358 = vmatpush2.msra.mxu0 %v41
    %359 = vmatprep.subr.mxu0 0.0
    %360 = vmatpush2.msra.mxu0 %v40
    %361 = vmatprep.subr.mxu0 0.0
    %362 = vmatpush2.msra.mxu0 %v39
    %363 = vmatprep.subr.mxu0 0.0
    %364 = vmatpush2.msra.mxu0 %v38
    %365 = vmatprep.subr.mxu0 0.0
    %366 = vmatpush2.msra.mxu0 %v37
    %367 = vmatprep.subr.mxu0 0.0
    %368 = vmatpush2.msra.mxu0 %v36
    %369 = vmatprep.mubr.f32.mxu0 %v249
    %370 = vmatmul.mubr.f32.gmra.mxu0 %v241
    %v371 = vpop.f32.mrf.mxu0
    %v372 = vadd.f32 %v229, %v371
    %v373 = vpop.f32.mrf.mxu0
    %374 = vdwg.mxu0
    %375 = vmatprep.subr.mxu0 0.0
    %376 = vmatpush1.msra.mxu0 %v67
    %377 = vmatprep.subr.mxu0 0.0
    %378 = vmatpush1.msra.mxu0 %v66
    %379 = vmatprep.subr.mxu0 0.0
    %380 = vmatpush1.msra.mxu0 %v65
    %381 = vmatprep.subr.mxu0 0.0
    %382 = vmatpush1.msra.mxu0 %v64
    %383 = vmatprep.subr.mxu0 0.0
    %384 = vmatpush1.msra.mxu0 %v63
    %385 = vmatprep.subr.mxu0 0.0
    %386 = vmatpush1.msra.mxu0 %v62
    %387 = vmatprep.subr.mxu0 0.0
    %388 = vmatpush1.msra.mxu0 %v61
    %389 = vmatprep.subr.mxu0 0.0
    %390 = vmatpush1.msra.mxu0 %v60
    %391 = vmatprep.subr.mxu0 0.0
    %392 = vmatpush1.msra.mxu0 %v59
    %393 = vmatprep.subr.mxu0 0.0
    %394 = vmatpush1.msra.mxu0 %v58
    %395 = vmatprep.subr.mxu0 0.0
    %396 = vmatpush1.msra.mxu0 %v57
    %397 = vmatprep.subr.mxu0 0.0
    %398 = vmatpush1.msra.mxu0 %v56
    %399 = vmatprep.subr.mxu0 0.0
    %400 = vmatpush1.msra.mxu0 %v55
    %401 = vmatprep.subr.mxu0 0.0
    %402 = vmatpush1.msra.mxu0 %v54
    %403 = vmatprep.subr.mxu0 0.0
    %404 = vmatpush1.msra.mxu0 %v53
    %405 = vmatprep.subr.mxu0 0.0
    %406 = vmatpush1.msra.mxu0 %v52
    %407 = vmatprep.subr.mxu0 0.0
    %408 = vmatpush2.msra.mxu0 %v83
    %409 = vmatprep.subr.mxu0 0.0
    %410 = vmatpush2.msra.mxu0 %v82
    %411 = vmatprep.subr.mxu0 0.0
    %412 = vmatpush2.msra.mxu0 %v81
    %413 = vmatprep.subr.mxu0 0.0
    %414 = vmatpush2.msra.mxu0 %v80
    %415 = vmatprep.subr.mxu0 0.0
    %416 = vmatpush2.msra.mxu0 %v79
    %417 = vmatprep.subr.mxu0 0.0
    %418 = vmatpush2.msra.mxu0 %v78
    %419 = vmatprep.subr.mxu0 0.0
    %420 = vmatpush2.msra.mxu0 %v77
    %421 = vmatprep.subr.mxu0 0.0
    %422 = vmatpush2.msra.mxu0 %v76
    %423 = vmatprep.subr.mxu0 0.0
    %424 = vmatpush2.msra.mxu0 %v75
    %425 = vmatprep.subr.mxu0 0.0
    %426 = vmatpush2.msra.mxu0 %v74
    %427 = vmatprep.subr.mxu0 0.0
    %428 = vmatpush2.msra.mxu0 %v73
    %429 = vmatprep.subr.mxu0 0.0
    %430 = vmatpush2.msra.mxu0 %v72
    %431 = vmatprep.subr.mxu0 0.0
    %432 = vmatpush2.msra.mxu0 %v71
    %433 = vmatprep.subr.mxu0 0.0
    %434 = vmatpush2.msra.mxu0 %v70
    %435 = vmatprep.subr.mxu0 0.0
    %436 = vmatpush2.msra.mxu0 %v69
    %437 = vmatprep.subr.mxu0 0.0
    %438 = vmatpush2.msra.mxu0 %v68
    %439 = vmatprep.mubr.f32.mxu0 %v250
    %440 = vmatmul.mubr.f32.gmra.mxu0 %v248
    %v441 = vpop.f32.mrf.mxu0
    %v442 = vadd.f32 %v372, %v441
    %v443 = vpop.f32.mrf.mxu0
    %444 = vdwg.mxu0
    %445 = vmatprep.subr.mxu0 0.0
    %446 = vmatpush1.msra.mxu0 %v99
    %447 = vmatprep.subr.mxu0 0.0
    %448 = vmatpush1.msra.mxu0 %v98
    %449 = vmatprep.subr.mxu0 0.0
    %450 = vmatpush1.msra.mxu0 %v97
    %451 = vmatprep.subr.mxu0 0.0
    %452 = vmatpush1.msra.mxu0 %v96
    %453 = vmatprep.subr.mxu0 0.0
    %454 = vmatpush1.msra.mxu0 %v95
    %455 = vmatprep.subr.mxu0 0.0
    %456 = vmatpush1.msra.mxu0 %v94
    %457 = vmatprep.subr.mxu0 0.0
    %458 = vmatpush1.msra.mxu0 %v93
    %459 = vmatprep.subr.mxu0 0.0
    %460 = vmatpush1.msra.mxu0 %v92
    %461 = vmatprep.subr.mxu0 0.0
    %462 = vmatpush1.msra.mxu0 %v91
    %463 = vmatprep.subr.mxu0 0.0
    %464 = vmatpush1.msra.mxu0 %v90
    %465 = vmatprep.subr.mxu0 0.0
    %466 = vmatpush1.msra.mxu0 %v89
    %467 = vmatprep.subr.mxu0 0.0
    %468 = vmatpush1.msra.mxu0 %v88
    %469 = vmatprep.subr.mxu0 0.0
    %470 = vmatpush1.msra.mxu0 %v87
    %471 = vmatprep.subr.mxu0 0.0
    %472 = vmatpush1.msra.mxu0 %v86
    %473 = vmatprep.subr.mxu0 0.0
    %474 = vmatpush1.msra.mxu0 %v85
    %475 = vmatprep.subr.mxu0 0.0
    %476 = vmatpush1.msra.mxu0 %v84
    %477 = vmatprep.subr.mxu0 0.0
    %478 = vmatpush2.msra.mxu0 %v115
    %479 = vmatprep.subr.mxu0 0.0
    %480 = vmatpush2.msra.mxu0 %v114
    %481 = vmatprep.subr.mxu0 0.0
    %482 = vmatpush2.msra.mxu0 %v113
    %483 = vmatprep.subr.mxu0 0.0
    %484 = vmatpush2.msra.mxu0 %v112
    %485 = vmatprep.subr.mxu0 0.0
    %486 = vmatpush2.msra.mxu0 %v111
    %487 = vmatprep.subr.mxu0 0.0
    %488 = vmatpush2.msra.mxu0 %v110
    %489 = vmatprep.subr.mxu0 0.0
    %490 = vmatpush2.msra.mxu0 %v109
    %491 = vmatprep.subr.mxu0 0.0
    %492 = vmatpush2.msra.mxu0 %v108
    %493 = vmatprep.subr.mxu0 0.0
    %494 = vmatpush2.msra.mxu0 %v107
    %495 = vmatprep.subr.mxu0 0.0
    %496 = vmatpush2.msra.mxu0 %v106
    %497 = vmatprep.subr.mxu0 0.0
    %498 = vmatpush2.msra.mxu0 %v105
    %499 = vmatprep.subr.mxu0 0.0
    %500 = vmatpush2.msra.mxu0 %v104
    %501 = vmatprep.subr.mxu0 0.0
    %502 = vmatpush2.msra.mxu0 %v103
    %503 = vmatprep.subr.mxu0 0.0
    %504 = vmatpush2.msra.mxu0 %v102
    %505 = vmatprep.subr.mxu0 0.0
    %506 = vmatpush2.msra.mxu0 %v101
    %507 = vmatprep.subr.mxu0 0.0
    %508 = vmatpush2.msra.mxu0 %v100
    %509 = vmatprep.mubr.f32.mxu0 %v266
    %510 = vmatmul.mubr.f32.gmra.mxu0 %v258
    %v511 = vpop.f32.mrf.mxu0
    %v512 = vadd.f32 %v442, %v511
    %v513 = vpop.f32.mrf.mxu0
    %514 = vdwg.mxu0
    %515 = vmatprep.subr.mxu0 0.0
    %516 = vmatpush1.msra.mxu0 %v131
    %517 = vmatprep.subr.mxu0 0.0
    %518 = vmatpush1.msra.mxu0 %v130
    %519 = vmatprep.subr.mxu0 0.0
    %520 = vmatpush1.msra.mxu0 %v129
    %521 = vmatprep.subr.mxu0 0.0
    %522 = vmatpush1.msra.mxu0 %v128
    %523 = vmatprep.subr.mxu0 0.0
    %524 = vmatpush1.msra.mxu0 %v127
    %525 = vmatprep.subr.mxu0 0.0
    %526 = vmatpush1.msra.mxu0 %v126
    %527 = vmatprep.subr.mxu0 0.0
    %528 = vmatpush1.msra.mxu0 %v125
    %529 = vmatprep.subr.mxu0 0.0
    %530 = vmatpush1.msra.mxu0 %v124
    %531 = vmatprep.subr.mxu0 0.0
    %532 = vmatpush1.msra.mxu0 %v123
    %533 = vmatprep.subr.mxu0 0.0
    %534 = vmatpush1.msra.mxu0 %v122
    %535 = vmatprep.subr.mxu0 0.0
    %536 = vmatpush1.msra.mxu0 %v121
    %537 = vmatprep.subr.mxu0 0.0
    %538 = vmatpush1.msra.mxu0 %v120
    %539 = vmatprep.subr.mxu0 0.0
    %540 = vmatpush1.msra.mxu0 %v119
    %541 = vmatprep.subr.mxu0 0.0
    %542 = vmatpush1.msra.mxu0 %v118
    %543 = vmatprep.subr.mxu0 0.0
    %544 = vmatpush1.msra.mxu0 %v117
    %545 = vmatprep.subr.mxu0 0.0
    %546 = vmatpush1.msra.mxu0 %v116
    %547 = vmatprep.subr.mxu0 0.0
    %548 = vmatpush2.msra.mxu0 %v147
    %549 = vmatprep.subr.mxu0 0.0
    %550 = vmatpush2.msra.mxu0 %v146
    %551 = vmatprep.subr.mxu0 0.0
    %552 = vmatpush2.msra.mxu0 %v145
    %553 = vmatprep.subr.mxu0 0.0
    %554 = vmatpush2.msra.mxu0 %v144
    %555 = vmatprep.subr.mxu0 0.0
    %556 = vmatpush2.msra.mxu0 %v143
    %557 = vmatprep.subr.mxu0 0.0
    %558 = vmatpush2.msra.mxu0 %v142
    %559 = vmatprep.subr.mxu0 0.0
    %560 = vmatpush2.msra.mxu0 %v141
    %561 = vmatprep.subr.mxu0 0.0
    %562 = vmatpush2.msra.mxu0 %v140
    %563 = vmatprep.subr.mxu0 0.0
    %564 = vmatpush2.msra.mxu0 %v139
    %565 = vmatprep.subr.mxu0 0.0
    %566 = vmatpush2.msra.mxu0 %v138
    %567 = vmatprep.subr.mxu0 0.0
    %568 = vmatpush2.msra.mxu0 %v137
    %569 = vmatprep.subr.mxu0 0.0
    %570 = vmatpush2.msra.mxu0 %v136
    %571 = vmatprep.subr.mxu0 0.0
    %572 = vmatpush2.msra.mxu0 %v135
    %573 = vmatprep.subr.mxu0 0.0
    %574 = vmatpush2.msra.mxu0 %v134
    %575 = vmatprep.subr.mxu0 0.0
    %576 = vmatpush2.msra.mxu0 %v133
    %577 = vmatprep.subr.mxu0 0.0
    %578 = vmatpush2.msra.mxu0 %v132
    %579 = vmatprep.mubr.f32.mxu0 %v267
    %580 = vmatmul.mubr.f32.gmra.mxu0 %v265
    %v581 = vpop.f32.mrf.mxu0
    %v582 = vadd.f32 %v512, %v581
    %v583 = vpop.f32.mrf.mxu0
    %584 = vdwg.mxu0
    %585 = vmatprep.subr.mxu0 0.0
    %586 = vmatpush1.msra.mxu0 %v163
    %587 = vmatprep.subr.mxu0 0.0
    %588 = vmatpush1.msra.mxu0 %v162
    %589 = vmatprep.subr.mxu0 0.0
    %590 = vmatpush1.msra.mxu0 %v161
    %591 = vmatprep.subr.mxu0 0.0
    %592 = vmatpush1.msra.mxu0 %v160
    %593 = vmatprep.subr.mxu0 0.0
    %594 = vmatpush1.msra.mxu0 %v159
    %595 = vmatprep.subr.mxu0 0.0
    %596 = vmatpush1.msra.mxu0 %v158
    %597 = vmatprep.subr.mxu0 0.0
    %598 = vmatpush1.msra.mxu0 %v157
    %599 = vmatprep.subr.mxu0 0.0
    %600 = vmatpush1.msra.mxu0 %v156
    %601 = vmatprep.subr.mxu0 0.0
    %602 = vmatpush1.msra.mxu0 %v155
    %603 = vmatprep.subr.mxu0 0.0
    %604 = vmatpush1.msra.mxu0 %v154
    %605 = vmatprep.subr.mxu0 0.0
    %606 = vmatpush1.msra.mxu0 %v153
    %607 = vmatprep.subr.mxu0 0.0
    %608 = vmatpush1.msra.mxu0 %v152
    %609 = vmatprep.subr.mxu0 0.0
    %610 = vmatpush1.msra.mxu0 %v151
    %611 = vmatprep.subr.mxu0 0.0
    %612 = vmatpush1.msra.mxu0 %v150
    %613 = vmatprep.subr.mxu0 0.0
    %614 = vmatpush1.msra.mxu0 %v149
    %615 = vmatprep.subr.mxu0 0.0
    %616 = vmatpush1.msra.mxu0 %v148
    %617 = vmatprep.subr.mxu0 0.0
    %618 = vmatpush2.msra.mxu0 %v179
    %619 = vmatprep.subr.mxu0 0.0
    %620 = vmatpush2.msra.mxu0 %v178
    %621 = vmatprep.subr.mxu0 0.0
    %622 = vmatpush2.msra.mxu0 %v177
    %623 = vmatprep.subr.mxu0 0.0
    %624 = vmatpush2.msra.mxu0 %v176
    %625 = vmatprep.subr.mxu0 0.0
    %626 = vmatpush2.msra.mxu0 %v175
    %627 = vmatprep.subr.mxu0 0.0
    %628 = vmatpush2.msra.mxu0 %v174
    %629 = vmatprep.subr.mxu0 0.0
    %630 = vmatpush2.msra.mxu0 %v173
    %631 = vmatprep.subr.mxu0 0.0
    %632 = vmatpush2.msra.mxu0 %v172
    %633 = vmatprep.subr.mxu0 0.0
    %634 = vmatpush2.msra.mxu0 %v171
    %635 = vmatprep.subr.mxu0 0.0
    %636 = vmatpush2.msra.mxu0 %v170
    %637 = vmatprep.subr.mxu0 0.0
    %638 = vmatpush2.msra.mxu0 %v169
    %639 = vmatprep.subr.mxu0 0.0
    %640 = vmatpush2.msra.mxu0 %v168
    %641 = vmatprep.subr.mxu0 0.0
    %642 = vmatpush2.msra.mxu0 %v167
    %643 = vmatprep.subr.mxu0 0.0
    %644 = vmatpush2.msra.mxu0 %v166
    %645 = vmatprep.subr.mxu0 0.0
    %646 = vmatpush2.msra.mxu0 %v165
    %647 = vmatprep.subr.mxu0 0.0
    %648 = vmatpush2.msra.mxu0 %v164
    %649 = vmatprep.mubr.f32.mxu0 %v283
    %650 = vmatmul.mubr.f32.gmra.mxu0 %v275
    %v651 = vpop.f32.mrf.mxu0
    %v652 = vadd.f32 %v582, %v651
    %v653 = vpop.f32.mrf.mxu0
    %654 = vdwg.mxu0
    %655 = vmatprep.subr.mxu0 0.0
    %656 = vmatpush1.msra.mxu0 %v195
    %657 = vmatprep.subr.mxu0 0.0
    %658 = vmatpush1.msra.mxu0 %v194
    %659 = vmatprep.subr.mxu0 0.0
    %660 = vmatpush1.msra.mxu0 %v193
    %661 = vmatprep.subr.mxu0 0.0
    %662 = vmatpush1.msra.mxu0 %v192
    %663 = vmatprep.subr.mxu0 0.0
    %664 = vmatpush1.msra.mxu0 %v191
    %665 = vmatprep.subr.mxu0 0.0
    %666 = vmatpush1.msra.mxu0 %v190
    %667 = vmatprep.subr.mxu0 0.0
    %668 = vmatpush1.msra.mxu0 %v189
    %669 = vmatprep.subr.mxu0 0.0
    %670 = vmatpush1.msra.mxu0 %v188
    %671 = vmatprep.subr.mxu0 0.0
    %672 = vmatpush1.msra.mxu0 %v187
    %673 = vmatprep.subr.mxu0 0.0
    %674 = vmatpush1.msra.mxu0 %v186
    %675 = vmatprep.subr.mxu0 0.0
    %676 = vmatpush1.msra.mxu0 %v185
    %677 = vmatprep.subr.mxu0 0.0
    %678 = vmatpush1.msra.mxu0 %v184
    %679 = vmatprep.subr.mxu0 0.0
    %680 = vmatpush1.msra.mxu0 %v183
    %681 = vmatprep.subr.mxu0 0.0
    %682 = vmatpush1.msra.mxu0 %v182
    %683 = vmatprep.subr.mxu0 0.0
    %684 = vmatpush1.msra.mxu0 %v181
    %685 = vmatprep.subr.mxu0 0.0
    %686 = vmatpush1.msra.mxu0 %v180
    %687 = vmatprep.subr.mxu0 0.0
    %688 = vmatpush2.msra.mxu0 %v211
    %689 = vmatprep.subr.mxu0 0.0
    %690 = vmatpush2.msra.mxu0 %v210
    %691 = vmatprep.subr.mxu0 0.0
    %692 = vmatpush2.msra.mxu0 %v209
    %693 = vmatprep.subr.mxu0 0.0
    %694 = vmatpush2.msra.mxu0 %v208
    %695 = vmatprep.subr.mxu0 0.0
    %696 = vmatpush2.msra.mxu0 %v207
    %697 = vmatprep.subr.mxu0 0.0
    %698 = vmatpush2.msra.mxu0 %v206
    %699 = vmatprep.subr.mxu0 0.0
    %700 = vmatpush2.msra.mxu0 %v205
    %701 = vmatprep.subr.mxu0 0.0
    %702 = vmatpush2.msra.mxu0 %v204
    %703 = vmatprep.subr.mxu0 0.0
    %704 = vmatpush2.msra.mxu0 %v203
    %705 = vmatprep.subr.mxu0 0.0
    %706 = vmatpush2.msra.mxu0 %v202
    %707 = vmatprep.subr.mxu0 0.0
    %708 = vmatpush2.msra.mxu0 %v201
    %709 = vmatprep.subr.mxu0 0.0
    %710 = vmatpush2.msra.mxu0 %v200
    %711 = vmatprep.subr.mxu0 0.0
    %712 = vmatpush2.msra.mxu0 %v199
    %713 = vmatprep.subr.mxu0 0.0
    %714 = vmatpush2.msra.mxu0 %v198
    %715 = vmatprep.subr.mxu0 0.0
    %716 = vmatpush2.msra.mxu0 %v197
    %717 = vmatprep.subr.mxu0 0.0
    %718 = vmatpush2.msra.mxu0 %v196
    %719 = vmatprep.mubr.f32.mxu0 %v284
    %720 = vmatmul.mubr.f32.gmra.mxu0 %v282
    %v721 = vpop.f32.mrf.mxu0
    %v722 = vadd.f32 %v652, %v721
    %v723 = vpop.f32.mrf.mxu0
    %724 = vdwg.mxu0
    %725 = vmatprep.subr.mxu0 0.0
    %726 = vmatpush1.msra.mxu0 %v227
    %727 = vmatprep.subr.mxu0 0.0
    %728 = vmatpush1.msra.mxu0 %v226
    %729 = vmatprep.subr.mxu0 0.0
    %730 = vmatpush1.msra.mxu0 %v225
    %731 = vmatprep.subr.mxu0 0.0
    %732 = vmatpush1.msra.mxu0 %v224
    %733 = vmatprep.subr.mxu0 0.0
    %734 = vmatpush1.msra.mxu0 %v223
    %735 = vmatprep.subr.mxu0 0.0
    %736 = vmatpush1.msra.mxu0 %v222
    %737 = vmatprep.subr.mxu0 0.0
    %738 = vmatpush1.msra.mxu0 %v221
    %739 = vmatprep.subr.mxu0 0.0
    %740 = vmatpush1.msra.mxu0 %v220
    %741 = vmatprep.subr.mxu0 0.0
    %742 = vmatpush1.msra.mxu0 %v219
    %743 = vmatprep.subr.mxu0 0.0
    %744 = vmatpush1.msra.mxu0 %v218
    %745 = vmatprep.subr.mxu0 0.0
    %746 = vmatpush1.msra.mxu0 %v217
    %747 = vmatprep.subr.mxu0 0.0
    %748 = vmatpush1.msra.mxu0 %v216
    %749 = vmatprep.subr.mxu0 0.0
    %750 = vmatpush1.msra.mxu0 %v215
    %751 = vmatprep.subr.mxu0 0.0
    %752 = vmatpush1.msra.mxu0 %v214
    %753 = vmatprep.subr.mxu0 0.0
    %754 = vmatpush1.msra.mxu0 %v213
    %755 = vmatprep.subr.mxu0 0.0
    %756 = vmatpush1.msra.mxu0 %v212
    %757 = vmatprep.subr.mxu0 0.0
    %758 = vmatpush2.msra.mxu0 0.0
    %759 = vmatprep.subr.mxu0 0.0
    %760 = vmatpush2.msra.mxu0 0.0
    %761 = vmatprep.subr.mxu0 0.0
    %762 = vmatpush2.msra.mxu0 0.0
    %763 = vmatprep.subr.mxu0 0.0
    %764 = vmatpush2.msra.mxu0 0.0
    %765 = vmatprep.subr.mxu0 0.0
    %766 = vmatpush2.msra.mxu0 0.0
    %767 = vmatprep.subr.mxu0 0.0
    %768 = vmatpush2.msra.mxu0 0.0
    %769 = vmatprep.subr.mxu0 0.0
    %770 = vmatpush2.msra.mxu0 0.0
    %771 = vmatprep.subr.mxu0 0.0
    %772 = vmatpush2.msra.mxu0 0.0
    %773 = vmatprep.subr.mxu0 0.0
    %774 = vmatpush2.msra.mxu0 0.0
    %775 = vmatprep.subr.mxu0 0.0
    %776 = vmatpush2.msra.mxu0 0.0
    %777 = vmatprep.subr.mxu0 0.0
    %778 = vmatpush2.msra.mxu0 0.0
    %779 = vmatprep.subr.mxu0 0.0
    %780 = vmatpush2.msra.mxu0 0.0
    %781 = vmatprep.subr.mxu0 0.0
    %782 = vmatpush2.msra.mxu0 0.0
    %783 = vmatprep.subr.mxu0 0.0
    %784 = vmatpush2.msra.mxu0 0.0
    %785 = vmatprep.subr.mxu0 0.0
    %786 = vmatpush2.msra.mxu0 0.0
    %787 = vmatprep.subr.mxu0 0.0
    %788 = vmatpush2.msra.mxu0 0.0
    %789 = vmatprep.mubr.f32.mxu0 0.0
    %790 = vmatmul.mubr.f32.gmra.mxu0 %v291
    %v791 = vpop.f32.mrf.mxu0
    %v792 = vadd.f32 %v722, %v791
    %v793 = vpop.f32.mrf.mxu0
    %794 = vdwg.mxu0
    %795 = vst [vmem:[#allocation3] sm:$0x3] %v792
    // Predicated region
    $region14: #{net_forward.1} parent=1 // pred_check
      _
    $region15: #{net_forward.1} parent=1 // pred_check_branch
      %797 = sbr.rel (0) target = $region17
    $region16: #{net_forward.1} parent=1 // pred_region
      %s799 = ssub.s32 32, 32
      %800 = vsyncadd [#allocation4], %s799
      %s802 = sshll.u32 [#allocation3], 4
      %s803 = int_to_ptr.vmem [resolvable:$true] %s802
      %805 = dma.vmem_to_hbm [thread:$0]  %s803, 32, %s3, [#allocation4]
    $region17: #{net_forward.1} parent=1 // pred_fallthru
      _
    // Predicated region
    $region18: #{net_forward.1} parent=1 // pred_check
      _
    $region19: #{net_forward.1} parent=1 // pred_check_branch
      %807 = sbr.rel (0) target = $region21
    $region20: #{net_forward.1} parent=1 // pred_region
      %808 = dma.done [#allocation4], 32
    $region21: #{net_forward.1} parent=1 // pred_fallthru
      _
    %809 = vsyncpa [#allocation4], 1

</llo_original>
